<compile_context>
chip_gen: v7x
topology: tpu7x:2x2x1
jax: 0.10.0
libtpu: 0.0.40
codegen_flags: <defaults>
</compile_context>

<pallas_src>
import functools

import jax
import jax.numpy as jnp
from jax.experimental import pallas as pl
from jax.experimental.pallas import tpu as pltpu


# ---------------------------------------------------------------------------
# Kernels
# ---------------------------------------------------------------------------
def se_fused_kernel(x_ref, w1_ref, b1_ref, w2_ref, b2_ref, o_ref):
    """Fused squeeze -> excite -> scale on a (Bt, C, HW) block.

    NOTE: HW must be the block's *full* spatial extent (the mean divisor below
    is the block width); only the batch axis may be tiled across the grid.
    """
    hw = x_ref.shape[2]
    wdt = w1_ref.dtype

    # squeeze: global average pool over the spatial (lane) axis, f32 accumulate.
    y = jnp.sum(x_ref[...], axis=2, dtype=jnp.float32) * (1.0 / hw)       # (Bt, C)

    # excitation: Linear(C -> C/r) + ReLU, Linear(C/r -> C) + Sigmoid.
    # Activations are cast to the weight storage dtype (no-op for f32 weights);
    # the MXU accumulates in f32 via preferred_element_type.
    h = jnp.dot(y.astype(wdt), w1_ref[...],
                preferred_element_type=jnp.float32) + b1_ref[...].astype(jnp.float32)
    h = jnp.maximum(h, 0.0)                                               # (Bt, C/r)
    s = jnp.dot(h.astype(wdt), w2_ref[...],
                preferred_element_type=jnp.float32) + b2_ref[...].astype(jnp.float32)
    s = jax.nn.sigmoid(s)                                                 # (Bt, C)

    # scale: broadcast s along the lane (HW) axis; only the tiny (Bt, C) scale
    # vector is relayouted (C moves from lanes to sublanes).
    o_ref[...] = x_ref[...] * s.astype(o_ref.dtype)[:, :, None]


def se_squeeze_kernel(x_ref, w1_ref, b1_ref, w2_ref, b2_ref, s_ref, *, hw_total):
    """Two-pass fallback, pass 1: pooled sum accumulated across HW tiles, then
    the excitation MLP on the last HW step.  s_ref (1, 1, C) f32 is resident
    across the HW ('arbitrary') grid axis and doubles as the accumulator."""
    j = pl.program_id(1)

    @pl.when(j == 0)
    def _init():
        s_ref[...] = jnp.zeros_like(s_ref)

    s_ref[...] += jnp.sum(x_ref[...], axis=2, dtype=jnp.float32)[:, None, :]

    @pl.when(j == pl.num_programs(1) - 1)
    def _finalize():
        wdt = w1_ref.dtype
        y = s_ref[0] * (1.0 / hw_total)                                    # (1, C)
        h = jnp.dot(y.astype(wdt), w1_ref[...],
                    preferred_element_type=jnp.float32) + b1_ref[...].astype(jnp.float32)
        h = jnp.maximum(h, 0.0)
        s = jnp.dot(h.astype(wdt), w2_ref[...],
                    preferred_element_type=jnp.float32) + b2_ref[...].astype(jnp.float32)
        s_ref[0] = jax.nn.sigmoid(s)


def se_scale_kernel(x_ref, s_ref, o_ref):
    """Two-pass fallback, pass 2: per-channel scale of a (1, C, HWt) tile."""
    s = s_ref[0].astype(o_ref.dtype)                                       # (1, C)
    o_ref[...] = x_ref[...] * s[:, :, None]


# ---------------------------------------------------------------------------
# Tiling / VMEM-budget helpers
# ---------------------------------------------------------------------------
_FALLBACK_VMEM_CAPACITY = 64 * 1024 * 1024     # v7x per-TensorCore VMEM (worst case)
_INTERNAL_SCRATCH_RESERVE = 2 * 1024 * 1024    # Mosaic internal-scratch headroom


def _vmem_capacity_bytes():
    try:
        return int(pltpu.get_tpu_info().vmem_capacity_bytes)
    except Exception:                           # conservative default
        return _FALLBACK_VMEM_CAPACITY


def _weight_vmem_bytes(*arrs):
    # Grid-invariant operands are single-buffered (pl.Buffered(1)).
    return sum(int(a.size) * a.dtype.itemsize for a in arrs)


def _invariant_spec(shape, index_map):
    """Grid-invariant operand: single VMEM buffer (constant index map, so a
    second pipeline buffer would be pure VMEM waste)."""
    try:
        return pl.BlockSpec(shape, index_map, pipeline_mode=pl.Buffered(1))
    except Exception:                           # older Pallas: default buffering
        return pl.BlockSpec(shape, index_map)


def _choose_block_batch(b, per_elem_bytes, tile_budget, *, min_steps, max_bt=256):
    """Largest per-step batch tile whose double-buffered in+out tiles fit the
    budget, keeps >= min_steps grid steps when the batch allows it, and divides
    B evenly.  Returns 0 if even a single batch element does not fit."""
    bt = min(b, max_bt, tile_budget // (4 * per_elem_bytes))
    if bt < 1:
        return 0
    bt = min(bt, max(1, b // min(b, min_steps)))
    while b % bt:
        bt -= 1
    return bt


def _choose_hw_tile(hw, max_hwt):
    """Largest divisor of hw that is <= max_hwt, preferring multiples of 128
    (lane-dense, unmasked stores)."""
    max_hwt = max(1, max_hwt)
    best128, best = 0, 1
    d = 1
    while d * d <= hw:
        if hw % d == 0:
            for cand in (d, hw // d):
                if cand <= max_hwt:
                    best = max(best, cand)
                    if cand % 128 == 0:
                        best128 = max(best128, cand)
        d += 1
    return best128 if best128 else best


# ---------------------------------------------------------------------------
# pallas_call wrappers
# ---------------------------------------------------------------------------
def _se_fused_call(x3, w1t, b1r, w2t, b2r, bt, vmem_limit):
    b, c, hw = x3.shape
    cr = w1t.shape[1]

    cost = pl.CostEstimate(
        flops=2 * b * c * hw + 4 * b * c * cr,            # pool + scale + 2 GEMMs
        transcendentals=b * c,                            # sigmoid
        bytes_accessed=2 * b * c * hw * x3.dtype.itemsize
        + _weight_vmem_bytes(w1t, b1r, w2t, b2r),
    )

    return pl.pallas_call(
        se_fused_kernel,
        out_shape=jax.ShapeDtypeStruct((b, c, hw), x3.dtype),
        grid=(b // bt,),
        in_specs=[
            pl.BlockSpec((bt, c, hw), lambda i: (i, 0, 0)),   # per-step x tile
            _invariant_spec((c, cr), lambda i: (0, 0)),       # w1^T
            _invariant_spec((1, cr), lambda i: (0, 0)),       # b1
            _invariant_spec((cr, c), lambda i: (0, 0)),       # w2^T
            _invariant_spec((1, c), lambda i: (0, 0)),        # b2
        ],
        out_specs=pl.BlockSpec((bt, c, hw), lambda i: (i, 0, 0)),
        compiler_params=pltpu.CompilerParams(
            dimension_semantics=("parallel",),
            vmem_limit_bytes=vmem_limit,
        ),
        cost_estimate=cost,
    )(x3, w1t, b1r, w2t, b2r)


def _se_two_pass_call(x3, w1t, b1r, w2t, b2r, tile_budget, vmem_limit, max_hw_tile):
    b, c, hw = x3.shape
    cr = w1t.shape[1]

    # The scale pass is the binding one: in + out HW tiles, each double-buffered.
    max_hwt = tile_budget // (4 * c * x3.dtype.itemsize)
    if max_hw_tile is not None:
        max_hwt = min(max_hwt, max_hw_tile)
    hwt = _choose_hw_tile(hw, max_hwt)
    n_hw = hw // hwt

    weight_specs = [
        _invariant_spec((c, cr), lambda i, j: (0, 0)),
        _invariant_spec((1, cr), lambda i, j: (0, 0)),
        _invariant_spec((cr, c), lambda i, j: (0, 0)),
        _invariant_spec((1, c), lambda i, j: (0, 0)),
    ]

    # Pass 1: squeeze + excitation -> per-(batch, channel) scale s, f32.
    s = pl.pallas_call(
        functools.partial(se_squeeze_kernel, hw_total=hw),
        out_shape=jax.ShapeDtypeStruct((b, 1, c), jnp.float32),
        grid=(b, n_hw),
        in_specs=[pl.BlockSpec((1, c, hwt), lambda i, j: (i, 0, j))] + weight_specs,
        out_specs=pl.BlockSpec((1, 1, c), lambda i, j: (i, 0, 0)),
        compiler_params=pltpu.CompilerParams(
            dimension_semantics=("parallel", "arbitrary"),
            vmem_limit_bytes=vmem_limit,
        ),
    )(x3, w1t, b1r, w2t, b2r)

    # Pass 2: scale each HW tile.
    return pl.pallas_call(
        se_scale_kernel,
        out_shape=jax.ShapeDtypeStruct((b, c, hw), x3.dtype),
        grid=(b, n_hw),
        in_specs=[
            pl.BlockSpec((1, c, hwt), lambda i, j: (i, 0, j)),
            pl.BlockSpec((1, 1, c), lambda i, j: (i, 0, 0)),
        ],
        out_specs=pl.BlockSpec((1, c, hwt), lambda i, j: (i, 0, j)),
        compiler_params=pltpu.CompilerParams(
            dimension_semantics=("parallel", "parallel"),
            vmem_limit_bytes=vmem_limit,
        ),
    )(x3, s)


@functools.partial(jax.jit, static_argnames=("force_two_pass", "max_hw_tile"))
def se_forward(x, w1, b1, w2, b2, *, force_two_pass=False, max_hw_tile=None):
    """x: (B, C, H, W) NCHW.  w1: (C/r, C), b1: (C/r,), w2: (C, C/r), b2: (C,)
    (PyTorch nn.Linear convention).  Returns (B, C, H, W)."""
    b, c, h, w = x.shape
    hw = h * w
    cr = w1.shape[0]

    # Layout plumbing: keep NCHW (free reshape only); transpose just the *tiny*
    # weight matrices so the MXU contracts over the lane axis of y.
    x3 = x.reshape(b, c, hw)
    w1t = w1.T                      # (C, C/r)
    w2t = w2.T                      # (C/r, C)
    b1r = b1.reshape(1, cr)
    b2r = b2.reshape(1, c)

    cap = _vmem_capacity_bytes()
    vmem_limit = (3 * cap) // 4     # ~96 MiB on 128-MiB parts, ~48 MiB on v7x
    weight_bytes = _weight_vmem_bytes(w1t, b1r, w2t, b2r)
    tile_budget = vmem_limit - weight_bytes - _INTERNAL_SCRATCH_RESERVE
    # v7x (64 MiB VMEM) has 2 TensorCores -> keep more grid steps to shard them.
    min_steps = 4 if cap <= 64 * 1024 * 1024 else 2
    # TODO(synk): for B < min_steps on v7x, an HW-split scale phase would let
    # both TensorCores participate; today those shapes run on one core.

    per_elem_bytes = c * hw * x.dtype.itemsize
    bt = 0
    if not force_two_pass and tile_budget > 0:
        bt = _choose_block_batch(b, per_elem_bytes, tile_budget, min_steps=min_steps)

    if bt >= 1:
        out3 = _se_fused_call(x3, w1t, b1r, w2t, b2r, bt, vmem_limit)
    else:
        out3 = _se_two_pass_call(x3, w1t, b1r, w2t, b2r,
                                 max(tile_budget, 1 << 20), vmem_limit, max_hw_tile)
    return out3.reshape(b, c, h, w)


def se_reference(x, w1, b1, w2, b2):
    y = jnp.mean(x, axis=(2, 3))                                  # (B, C)
    h = jnp.maximum(y @ w1.T + b1, 0.0)
    s = jax.nn.sigmoid(h @ w2.T + b2)
    return x * s[:, :, None, None]


if __name__ == "__main__":
    B, C, H, W = 2, 8, 16, 16
    reduction = 4
    Cr = C // reduction

    key = jax.random.PRNGKey(0)
    kx, k1, k2, k3, k4 = jax.random.split(key, 5)

    x = jax.random.normal(kx, (B, C, H, W), dtype=jnp.float32)
    # deterministic synthetic parameters (shapes match nn.Linear in the module)
    w1 = jax.random.normal(k1, (Cr, C), dtype=jnp.float32) * 0.1
    b1 = jax.random.normal(k2, (Cr,), dtype=jnp.float32) * 0.1
    w2 = jax.random.normal(k3, (C, Cr), dtype=jnp.float32) * 0.1
    b2 = jax.random.normal(k4, (C,), dtype=jnp.float32) * 0.1

    ref = se_reference(x, w1, b1, w2, b2)

    # Fused single-kernel path (the production path).
    out = se_forward(x, w1, b1, w2, b2)
    jax.block_until_ready(out)
    assert out.shape == (B, C, H, W)
    assert jnp.allclose(out, ref, atol=1e-5, rtol=1e-5), "fused path mismatch"

    # Two-pass HW-tiled fallback, forced with 2 HW tiles so the accumulator /
    # pl.when finalize structure is actually exercised.
    out2 = se_forward(x, w1, b1, w2, b2, force_two_pass=True, max_hw_tile=128)
    jax.block_until_ready(out2)
    assert jnp.allclose(out2, ref, atol=1e-5, rtol=1e-5), "two-pass path mismatch"

    print("KERNEL_OK")
</pallas_src>

<mosaic_0001>
module attributes {stable_mosaic.version = 11 : i64} {
  func.func @se_fused_kernel(%arg0: i32, %arg1: memref<1x8x256xf32, #tpu.memory_space<vmem>>, %arg2: memref<8x2xf32, #tpu.memory_space<vmem>>, %arg3: memref<1x2xf32, #tpu.memory_space<vmem>>, %arg4: memref<2x8xf32, #tpu.memory_space<vmem>>, %arg5: memref<1x8xf32, #tpu.memory_space<vmem>>, %arg6: memref<1x8x256xf32, #tpu.memory_space<vmem>>) attributes {dimension_semantics = [#tpu.dimension_semantics<parallel>], iteration_bounds = array<i64: 2>, scalar_prefetch = 0 : i64, scratch_operands = 0 : i64, tpu.core_type = #tpu.core_type<tc>, window_params = [{transform_indices = @transform_0, window_bounds = array<i64: 1, 8, 256>}, {pipeline_mode = #tpu.pipeline_mode<synchronous>, transform_indices = @transform_1, window_bounds = array<i64: 8, 2>}, {pipeline_mode = #tpu.pipeline_mode<synchronous>, transform_indices = @transform_2, window_bounds = array<i64: 1, 2>}, {pipeline_mode = #tpu.pipeline_mode<synchronous>, transform_indices = @transform_3, window_bounds = array<i64: 2, 8>}, {pipeline_mode = #tpu.pipeline_mode<synchronous>, transform_indices = @transform_4, window_bounds = array<i64: 1, 8>}, {transform_indices = @transform_5, window_bounds = array<i64: 1, 8, 256>}]} {
    %c0 = arith.constant 0 : index
    %c0_0 = arith.constant 0 : index
    %c0_1 = arith.constant 0 : index
    %0 = vector.load %arg1[%c0, %c0_0, %c0_1] : memref<1x8x256xf32, #tpu.memory_space<vmem>>, vector<1x8x256xf32>
    %cst = arith.constant dense<0.000000e+00> : vector<1x8xf32>
    %1 = vector.multi_reduction <add>, %0, %cst [2] : vector<1x8x256xf32> to vector<1x8xf32>
    %cst_2 = arith.constant 3.906250e-03 : f32
    %2 = vector.broadcast %cst_2 : f32 to vector<1x8xf32>
    %3 = arith.mulf %1, %2 : vector<1x8xf32>
    %c0_3 = arith.constant 0 : index
    %c0_4 = arith.constant 0 : index
    %4 = vector.load %arg2[%c0_3, %c0_4] : memref<8x2xf32, #tpu.memory_space<vmem>>, vector<8x2xf32>
    %cst_5 = arith.constant dense<0.000000e+00> : vector<1x2xf32>
    %5 = tpu.matmul %3, %4, %cst_5 {dimension_numbers = #tpu.dot_dimension_numbers<[1], [0], [0], [1], [0, 0, 1, 1], [], []>} : vector<1x8xf32>, vector<8x2xf32>, vector<1x2xf32> -> vector<1x2xf32>
    %c0_6 = arith.constant 0 : index
    %c0_7 = arith.constant 0 : index
    %6 = vector.load %arg3[%c0_6, %c0_7] : memref<1x2xf32, #tpu.memory_space<vmem>>, vector<1x2xf32>
    %7 = arith.addf %5, %6 : vector<1x2xf32>
    %cst_8 = arith.constant 0.000000e+00 : f32
    %8 = vector.broadcast %cst_8 : f32 to vector<1x2xf32>
    %9 = arith.maximumf %7, %8 : vector<1x2xf32>
    %c0_9 = arith.constant 0 : index
    %c0_10 = arith.constant 0 : index
    %10 = vector.load %arg4[%c0_9, %c0_10] : memref<2x8xf32, #tpu.memory_space<vmem>>, vector<2x8xf32>
    %cst_11 = arith.constant dense<0.000000e+00> : vector<1x8xf32>
    %11 = tpu.matmul %9, %10, %cst_11 {dimension_numbers = #tpu.dot_dimension_numbers<[1], [0], [0], [1], [0, 0, 1, 1], [], []>} : vector<1x2xf32>, vector<2x8xf32>, vector<1x8xf32> -> vector<1x8xf32>
    %c0_12 = arith.constant 0 : index
    %c0_13 = arith.constant 0 : index
    %12 = vector.load %arg5[%c0_12, %c0_13] : memref<1x8xf32, #tpu.memory_space<vmem>>, vector<1x8xf32>
    %13 = arith.addf %11, %12 : vector<1x8xf32>
    %14 = arith.negf %13 : vector<1x8xf32>
    %15 = math.exp %14 : vector<1x8xf32>
    %cst_14 = arith.constant 1.000000e+00 : f32
    %16 = vector.broadcast %cst_14 : f32 to vector<1x8xf32>
    %17 = arith.addf %16, %15 : vector<1x8xf32>
    %18 = arith.divf %16, %17 : vector<1x8xf32>
    %c0_15 = arith.constant 0 : index
    %c0_16 = arith.constant 0 : index
    %c0_17 = arith.constant 0 : index
    %19 = vector.load %arg1[%c0_15, %c0_16, %c0_17] : memref<1x8x256xf32, #tpu.memory_space<vmem>>, vector<1x8x256xf32>
    %20 = vector.shape_cast %18 : vector<1x8xf32> to vector<1x8x1xf32>
    %21 = vector.broadcast %20 : vector<1x8x1xf32> to vector<1x8x256xf32>
    %22 = arith.mulf %19, %21 : vector<1x8x256xf32>
    %c0_18 = arith.constant 0 : index
    %c0_19 = arith.constant 0 : index
    %c0_20 = arith.constant 0 : index
    %23 = vector.load %arg6[%c0_18, %c0_19, %c0_20] : memref<1x8x256xf32, #tpu.memory_space<vmem>>, vector<1x8x256xf32>
    tpu.vector_store %arg6[%c0_18, %c0_19, %c0_20], %22 {strides = array<i32>} : memref<1x8x256xf32, #tpu.memory_space<vmem>>, vector<1x8x256xf32>,
    return
  }
  func.func @transform_0(%arg0: i32) -> (i32, i32, i32) {
    %c0_i32 = arith.constant 0 : i32
    %c0_i32_0 = arith.constant 0 : i32
    %c0_i32_1 = arith.constant 0 : i32
    return %arg0, %c0_i32, %c0_i32_0 : i32, i32, i32
  }
  func.func @transform_1(%arg0: i32) -> (i32, i32) {
    %c0_i32 = arith.constant 0 : i32
    %c0_i32_0 = arith.constant 0 : i32
    %c0_i32_1 = arith.constant 0 : i32
    return %c0_i32, %c0_i32_0 : i32, i32
  }
  func.func @transform_2(%arg0: i32) -> (i32, i32) {
    %c0_i32 = arith.constant 0 : i32
    %c0_i32_0 = arith.constant 0 : i32
    %c0_i32_1 = arith.constant 0 : i32
    return %c0_i32, %c0_i32_0 : i32, i32
  }
  func.func @transform_3(%arg0: i32) -> (i32, i32) {
    %c0_i32 = arith.constant 0 : i32
    %c0_i32_0 = arith.constant 0 : i32
    %c0_i32_1 = arith.constant 0 : i32
    return %c0_i32, %c0_i32_0 : i32, i32
  }
  func.func @transform_4(%arg0: i32) -> (i32, i32) {
    %c0_i32 = arith.constant 0 : i32
    %c0_i32_0 = arith.constant 0 : i32
    %c0_i32_1 = arith.constant 0 : i32
    return %c0_i32, %c0_i32_0 : i32, i32
  }
  func.func @transform_5(%arg0: i32) -> (i32, i32, i32) {
    %c0_i32 = arith.constant 0 : i32
    %c0_i32_0 = arith.constant 0 : i32
    %c0_i32_1 = arith.constant 0 : i32
    return %arg0, %c0_i32, %c0_i32_0 : i32, i32, i32
  }
}

</mosaic_0001>

<llo_original>
// kernel: se_forward.1
$region0: #{se_forward.1}
  #allocation0 [shape = 'u32[]', space=smem, size = 0x4, offset = 0x4, fixed_abs, tag = 'smem constant byte address 0x4 - core index']
  #allocation1 [shape = 'u32[144,128]{1,0:T(1,128)}', space=vmem, size = 0x12000, scoped, tag = 'internal scratch']
  %s0 = inlined_call_operand.vmem [shape: f32[2,8,256], index: 0, kind: input, shape index: {}]
  %s1 = inlined_call_operand.vmem [shape: f32[8,2], index: 1, kind: input, shape index: {}]
  %s2 = inlined_call_operand.vmem [shape: f32[1,2], index: 2, kind: input, shape index: {}]
  %s3 = inlined_call_operand.vmem [shape: f32[2,8], index: 3, kind: input, shape index: {}]
  %s4 = inlined_call_operand.vmem [shape: f32[1,8], index: 4, kind: input, shape index: {}]
  %s5 = inlined_call_operand.vmem [shape: f32[2,8,256], index: 5, kind: output, shape index: {}]
  %s6 = sld [smem:[#allocation0]]
  $region53: #{se_forward.1} parent=0
    _
  %s8 = ssub.s32 1, %s6
  %s9 = scalar_select 0, %s8, %s6
  loop: start=0, step=1, limit=4
  $region2: #{se_forward.1} parent=0 // loop_pre_header
    _
  $region3: #{se_forward.1} parent=0 // loop_header
    %s11 = sphi 0, %s15
    %p12 = scmp.ge.s32.totalorder %s11, 4
    %s21 = sphi 0, %s23
    %s24 = sphi 0, %s21
    %s25 = sphi 0, %s24
    %s41 = sphi 0, %s25
    %s45 = sphi 0, %s45
    %s47 = sphi 0, %s45
    %s48 = sphi 0, %s47
    %s62 = sphi 0, %s48
    %s66 = sphi 0, %s66
    %s68 = sphi 0, %s66
    %s69 = sphi 0, %s68
    %s83 = sphi 0, %s69
    %s87 = sphi 0, %s87
    %s89 = sphi 0, %s87
    %s90 = sphi 0, %s89
    %s104 = sphi 0, %s90
    %s108 = sphi 0, %s108
    %s110 = sphi 0, %s108
    %s111 = sphi 0, %s110
    %s125 = sphi 0, %s111
    %s131 = sphi 0, %s133
    %s134 = sphi 0, %s131
    %s135 = sphi 0, %s134
    %s151 = sphi 0, %s135
  $region4: #{se_forward.1} parent=0 // loop_header_branch
    %14 = sbr.rel (%p12) target = $region8
  $region5: #{se_forward.1} parent=0 // loop_body
    %s16 = ssub.s32 %s11, 1
    %s17 = ssub.s32 %s11, 2
    %s18 = sadd.s32 %s11, 1
    %s19 = ssub.s32 %s11, %s18
    %p20 = scmp.eq.s32.totalorder %s19, 0
    %s22 = sadd.s32 %s21, 1
    %s23 = scalar_select %p20, %s21, %s22
    %p26 = pneg %p20
    %p27 = scmp.eq.s32.totalorder %s11, 1
    %p28 = por %p26, %p27
    %p29 = scmp.ne.s32.totalorder %s21, %s24
    %p30 = scmp.eq.s32.totalorder %s11, 0
    %p31 = por %p29, %p30
    %p32 = scmp.ne.s32.totalorder %s21, %s24
    %p33 = scmp.eq.s32.totalorder %s16, 1
    %p34 = por %p32, %p33
    %p35 = scmp.ne.s32.totalorder %s24, %s25
    %p36 = scmp.eq.s32.totalorder %s16, 0
    %p37 = por %p35, %p36
    %p38 = scmp.ne.s32.totalorder %s24, %s25
    %p39 = scmp.eq.s32.totalorder %s17, 1
    %p40 = por %p38, %p39
    %p42 = scmp.ne.s32.totalorder %s25, %s41
    %p43 = scmp.eq.s32.totalorder %s17, 0
    %p44 = por %p42, %p43
    %s46 = sadd.s32 %s45, 1
    %p49 = scmp.eq.s32.totalorder %s11, 1
    %p50 = scmp.ne.s32.totalorder %s45, %s47
    %p51 = scmp.eq.s32.totalorder %s11, 0
    %p52 = por %p50, %p51
    %p53 = scmp.ne.s32.totalorder %s45, %s47
    %p54 = scmp.eq.s32.totalorder %s16, 1
    %p55 = por %p53, %p54
    %p56 = scmp.ne.s32.totalorder %s47, %s48
    %p57 = scmp.eq.s32.totalorder %s16, 0
    %p58 = por %p56, %p57
    %p59 = scmp.ne.s32.totalorder %s47, %s48
    %p60 = scmp.eq.s32.totalorder %s17, 1
    %p61 = por %p59, %p60
    %p63 = scmp.ne.s32.totalorder %s48, %s62
    %p64 = scmp.eq.s32.totalorder %s17, 0
    %p65 = por %p63, %p64
    %s67 = sadd.s32 %s66, 1
    %p70 = scmp.eq.s32.totalorder %s11, 1
    %p71 = scmp.ne.s32.totalorder %s66, %s68
    %p72 = scmp.eq.s32.totalorder %s11, 0
    %p73 = por %p71, %p72
    %p74 = scmp.ne.s32.totalorder %s66, %s68
    %p75 = scmp.eq.s32.totalorder %s16, 1
    %p76 = por %p74, %p75
    %p77 = scmp.ne.s32.totalorder %s68, %s69
    %p78 = scmp.eq.s32.totalorder %s16, 0
    %p79 = por %p77, %p78
    %p80 = scmp.ne.s32.totalorder %s68, %s69
    %p81 = scmp.eq.s32.totalorder %s17, 1
    %p82 = por %p80, %p81
    %p84 = scmp.ne.s32.totalorder %s69, %s83
    %p85 = scmp.eq.s32.totalorder %s17, 0
    %p86 = por %p84, %p85
    %s88 = sadd.s32 %s87, 1
    %p91 = scmp.eq.s32.totalorder %s11, 1
    %p92 = scmp.ne.s32.totalorder %s87, %s89
    %p93 = scmp.eq.s32.totalorder %s11, 0
    %p94 = por %p92, %p93
    %p95 = scmp.ne.s32.totalorder %s87, %s89
    %p96 = scmp.eq.s32.totalorder %s16, 1
    %p97 = por %p95, %p96
    %p98 = scmp.ne.s32.totalorder %s89, %s90
    %p99 = scmp.eq.s32.totalorder %s16, 0
    %p100 = por %p98, %p99
    %p101 = scmp.ne.s32.totalorder %s89, %s90
    %p102 = scmp.eq.s32.totalorder %s17, 1
    %p103 = por %p101, %p102
    %p105 = scmp.ne.s32.totalorder %s90, %s104
    %p106 = scmp.eq.s32.totalorder %s17, 0
    %p107 = por %p105, %p106
    %s109 = sadd.s32 %s108, 1
    %p112 = scmp.eq.s32.totalorder %s11, 1
    %p113 = scmp.ne.s32.totalorder %s108, %s110
    %p114 = scmp.eq.s32.totalorder %s11, 0
    %p115 = por %p113, %p114
    %p116 = scmp.ne.s32.totalorder %s108, %s110
    %p117 = scmp.eq.s32.totalorder %s16, 1
    %p118 = por %p116, %p117
    %p119 = scmp.ne.s32.totalorder %s110, %s111
    %p120 = scmp.eq.s32.totalorder %s16, 0
    %p121 = por %p119, %p120
    %p122 = scmp.ne.s32.totalorder %s110, %s111
    %p123 = scmp.eq.s32.totalorder %s17, 1
    %p124 = por %p122, %p123
    %p126 = scmp.ne.s32.totalorder %s111, %s125
    %p127 = scmp.eq.s32.totalorder %s17, 0
    %p128 = por %p126, %p127
    %s129 = ssub.s32 %s11, %s18
    %p130 = scmp.eq.s32.totalorder %s129, 0
    %s132 = sadd.s32 %s131, 1
    %s133 = scalar_select %p130, %s131, %s132
    %p136 = pneg %p130
    %p137 = scmp.eq.s32.totalorder %s11, 1
    %p138 = por %p136, %p137
    %p139 = scmp.ne.s32.totalorder %s131, %s134
    %p140 = scmp.eq.s32.totalorder %s11, 0
    %p141 = por %p139, %p140
    %p142 = scmp.ne.s32.totalorder %s131, %s134
    %p143 = scmp.eq.s32.totalorder %s16, 1
    %p144 = por %p142, %p143
    %p145 = scmp.ne.s32.totalorder %s134, %s135
    %p146 = scmp.eq.s32.totalorder %s16, 0
    %p147 = por %p145, %p146
    %p148 = scmp.ne.s32.totalorder %s134, %s135
    %p149 = scmp.eq.s32.totalorder %s17, 1
    %p150 = por %p148, %p149
    %p152 = scmp.ne.s32.totalorder %s135, %s151
    %p153 = scmp.eq.s32.totalorder %s17, 0
    %p154 = por %p152, %p153
    %p155 = scmp.le.s32.totalorder 1, %s11
    %p156 = scmp.lt.s32.totalorder %s11, 3
    %p157 = pnand %p155, %p156
    %p158 = pneg %p157
    // Predicated region
    $region9: #{se_forward.1} parent=5 // pred_check
      _
    $region10: #{se_forward.1} parent=5 // pred_check_branch
      %160 = sbr.rel (%p157) target = $region12
    $region11: #{se_forward.1} parent=5 // pred_region
      %s161 = ssub.s32 %s11, 1
      // Predicated region
      $region13: #{se_forward.1} parent=11 // pred_check
        %p162 = pneg %p58
      $region14: #{se_forward.1} parent=11 // pred_check_branch
        %164 = sbr.rel (%p162) target = $region16
      $region15: #{se_forward.1} parent=11 // pred_region
        _
      $region16: #{se_forward.1} parent=11 // pred_fallthru
        _
      // Predicated region
      $region17: #{se_forward.1} parent=11 // pred_check
        %p165 = pneg %p79
      $region18: #{se_forward.1} parent=11 // pred_check_branch
        %167 = sbr.rel (%p165) target = $region20
      $region19: #{se_forward.1} parent=11 // pred_region
        _
      $region20: #{se_forward.1} parent=11 // pred_fallthru
        _
      // Predicated region
      $region21: #{se_forward.1} parent=11 // pred_check
        %p168 = pneg %p100
      $region22: #{se_forward.1} parent=11 // pred_check_branch
        %170 = sbr.rel (%p168) target = $region24
      $region23: #{se_forward.1} parent=11 // pred_region
        _
      $region24: #{se_forward.1} parent=11 // pred_fallthru
        _
      // Predicated region
      $region25: #{se_forward.1} parent=11 // pred_check
        %p171 = pneg %p121
      $region26: #{se_forward.1} parent=11 // pred_check_branch
        %173 = sbr.rel (%p171) target = $region28
      $region27: #{se_forward.1} parent=11 // pred_region
        _
      $region28: #{se_forward.1} parent=11 // pred_fallthru
        _
    $region12: #{se_forward.1} parent=5 // pred_fallthru
      _
    %p174 = scmp.lt.s32.totalorder %s11, 2
    // Predicated region
    $region29: #{se_forward.1} parent=5 // pred_check
      %p175 = pneg %p174
    $region30: #{se_forward.1} parent=5 // pred_check_branch
      %177 = sbr.rel (%p175) target = $region32
    $region31: #{se_forward.1} parent=5 // pred_region
      // Predicated region
      $region33: #{se_forward.1} parent=31 // pred_check
        %p178 = pneg %p31
      $region34: #{se_forward.1} parent=31 // pred_check_branch
        %180 = sbr.rel (%p178) target = $region36
      $region35: #{se_forward.1} parent=31 // pred_region
        %p181 = scmp.lt.s32.totalorder %s11, 1
        %s182 = scalar_select %p181, %s11, 1
        %s183 = smul.addr %s182, 2
        %s184 = smul.addr %s183, 8
        %s185 = scalar_lea.vmem %s0, %s184
      $region36: #{se_forward.1} parent=31 // pred_fallthru
        _
    $region32: #{se_forward.1} parent=5 // pred_fallthru
      _
    %p186 = scmp.le.s32.totalorder 1, %s11
    %p187 = scmp.lt.s32.totalorder %s11, 3
    %p188 = pnand %p186, %p187
    %p189 = pneg %p188
    // Predicated region
    $region37: #{se_forward.1} parent=5 // pred_check
      _
    $region38: #{se_forward.1} parent=5 // pred_check_branch
      %191 = sbr.rel (%p188) target = $region40
    $region39: #{se_forward.1} parent=5 // pred_region
      %s192 = ssub.s32 %s11, 1
      %p193 = scmp.lt.s32.totalorder %s16, 1
      %s194 = scalar_select %p193, %s16, 1
      %s195 = smul.addr %s194, 2
      %s196 = smul.addr %s195, 8
      %s197 = scalar_lea.vmem %s0, %s196
      %p198 = pneg %p37
      %p199 = pneg %p34
      %p200 = pneg %p58
      %p201 = pneg %p55
      %p202 = pneg %p79
      %p203 = pneg %p76
      %p204 = pneg %p100
      %p205 = pneg %p97
      %p206 = pneg %p121
      %p207 = pneg %p118
      %p208 = pneg %p147
      %p209 = pneg %p144
      %p210 = scmp.lt.s32.totalorder %s16, 1
      %s211 = scalar_select %p210, %s16, 1
      %s212 = smul.addr %s211, 2
      %s213 = smul.addr %s212, 8
      %s214 = scalar_lea.vmem %s5, %s213
      %p215 = scmp.lt.s32.totalorder %s16, 1
      %s216 = scalar_select %p215, %s16, 1
      %s217 = smul.addr %s216, 2
      %s218 = smul.addr %s217, 8
      %s219 = scalar_lea.vmem %s0, %s218
      %p220 = scmp.lt.s32.totalorder %s16, 1
      %s221 = scalar_select %p220, %s16, 1
      %s222 = smul.addr %s221, 2
      %s223 = smul.addr %s222, 8
      %s224 = scalar_lea.vmem %s5, %s223
      %v225 = vld [vmem:[%s219] sm:$0xff]
      %v226 = vld [vmem:[%s219 + $0x8] sm:$0xff]
      %v227 = vadd.f32 %v225, %v226
      %228 = vadd.xlane.f32.xlu0 %v227
      %v229 = vpop.xlane.xlu0 %228
      %v230 = vmul.f32 %v229, 0.00390625
      %v231 = vld [vmem:[%s1] sm:$0xff]
      %v232 = vld [vmem:[%s2] sm:$0x1]
      %v234 = vlaneseq
      %v235 = vand.u32 %v234, 127
      %v236 = vlaneseq
      %v237 = vshrl.u32 %v236, 7
      %v238 = vsub.s32 %v235, %v237
      %v239 = vrot.slane %v230, %v238
      %vm240 = vcmask 64512
      %v241 = vsel %vm240, %v239, 0
      %243 = vmatprep.subr.mxu0 0.0
      %244 = vmatpush1.msra.mxu0 %v231
      %245 = vmatprep.subr.mxu0 0.0
      %246 = vmatpush1.msra.mxu0 0.0
      %247 = vmatprep.subr.mxu0 0.0
      %248 = vmatpush1.msra.mxu0 0.0
      %249 = vmatprep.subr.mxu0 0.0
      %250 = vmatpush1.msra.mxu0 0.0
      %251 = vmatprep.subr.mxu0 0.0
      %252 = vmatpush1.msra.mxu0 0.0
      %253 = vmatprep.subr.mxu0 0.0
      %254 = vmatpush1.msra.mxu0 0.0
      %255 = vmatprep.subr.mxu0 0.0
      %256 = vmatpush1.msra.mxu0 0.0
      %257 = vmatprep.subr.mxu0 0.0
      %258 = vmatpush1.msra.mxu0 0.0
      %259 = vmatprep.subr.mxu0 0.0
      %260 = vmatpush1.msra.mxu0 0.0
      %261 = vmatprep.subr.mxu0 0.0
      %262 = vmatpush1.msra.mxu0 0.0
      %263 = vmatprep.subr.mxu0 0.0
      %264 = vmatpush1.msra.mxu0 0.0
      %265 = vmatprep.subr.mxu0 0.0
      %266 = vmatpush1.msra.mxu0 0.0
      %267 = vmatprep.subr.mxu0 0.0
      %268 = vmatpush1.msra.mxu0 0.0
      %269 = vmatprep.subr.mxu0 0.0
      %270 = vmatpush1.msra.mxu0 0.0
      %271 = vmatprep.subr.mxu0 0.0
      %272 = vmatpush1.msra.mxu0 0.0
      %273 = vmatprep.subr.mxu0 0.0
      %274 = vmatpush1.msra.mxu0 0.0
      %275 = vmatprep.subr.mxu0 0.0
      %276 = vmatpush1.msra.mxu0 0.0
      %277 = vmatprep.subr.mxu0 0.0
      %278 = vmatpush1.msra.mxu0 0.0
      %279 = vmatprep.subr.mxu0 0.0
      %280 = vmatpush1.msra.mxu0 0.0
      %281 = vmatprep.subr.mxu0 0.0
      %282 = vmatpush1.msra.mxu0 0.0
      %283 = vmatprep.subr.mxu0 0.0
      %284 = vmatpush1.msra.mxu0 0.0
      %285 = vmatprep.subr.mxu0 0.0
      %286 = vmatpush1.msra.mxu0 0.0
      %287 = vmatprep.subr.mxu0 0.0
      %288 = vmatpush1.msra.mxu0 0.0
      %289 = vmatprep.subr.mxu0 0.0
      %290 = vmatpush1.msra.mxu0 0.0
      %291 = vmatprep.subr.mxu0 0.0
      %292 = vmatpush1.msra.mxu0 0.0
      %293 = vmatprep.subr.mxu0 0.0
      %294 = vmatpush1.msra.mxu0 0.0
      %295 = vmatprep.subr.mxu0 0.0
      %296 = vmatpush1.msra.mxu0 0.0
      %297 = vmatprep.subr.mxu0 0.0
      %298 = vmatpush1.msra.mxu0 0.0
      %299 = vmatprep.subr.mxu0 0.0
      %300 = vmatpush1.msra.mxu0 0.0
      %301 = vmatprep.subr.mxu0 0.0
      %302 = vmatpush1.msra.mxu0 0.0
      %303 = vmatprep.subr.mxu0 0.0
      %304 = vmatpush1.msra.mxu0 0.0
      %305 = vmatprep.subr.mxu0 0.0
      %306 = vmatpush1.msra.mxu0 0.0
      %307 = vmatprep.mubr.f32.mxu0 0.0
      %308 = vmatmul.mubr.f32.gmra.mrb[0].mxu0 %v241
      %v309 = vpop.f32.mrb[0].mxu0
      %v310 = vadd.f32 %v232, %v309
      %v311 = vpop.f32.mrb[0].mxu0
      %312 = vdwg.mxu0
      %v313 = vmax.f32 %v310, 0.0
      %v314 = vld [vmem:[%s3] sm:$0x3]
      %v315 = vld [vmem:[%s4] sm:$0x1]
      %vm316 = vcmask 15360
      %v318 = vsel %vm316, %v313, 0
      %vm320 = vcmask 1041408
      %v322 = vsel %vm320, %v314, 0
      %324 = vmatprep.subr.mxu0 0.0
      %325 = vmatpush1.msra.mxu0 %v322
      %326 = vmatprep.subr.mxu0 0.0
      %327 = vmatpush1.msra.mxu0 0.0
      %328 = vmatprep.subr.mxu0 0.0
      %329 = vmatpush1.msra.mxu0 0.0
      %330 = vmatprep.subr.mxu0 0.0
      %331 = vmatpush1.msra.mxu0 0.0
      %332 = vmatprep.subr.mxu0 0.0
      %333 = vmatpush1.msra.mxu0 0.0
      %334 = vmatprep.subr.mxu0 0.0
      %335 = vmatpush1.msra.mxu0 0.0
      %336 = vmatprep.subr.mxu0 0.0
      %337 = vmatpush1.msra.mxu0 0.0
      %338 = vmatprep.subr.mxu0 0.0
      %339 = vmatpush1.msra.mxu0 0.0
      %340 = vmatprep.subr.mxu0 0.0
      %341 = vmatpush1.msra.mxu0 0.0
      %342 = vmatprep.subr.mxu0 0.0
      %343 = vmatpush1.msra.mxu0 0.0
      %344 = vmatprep.subr.mxu0 0.0
      %345 = vmatpush1.msra.mxu0 0.0
      %346 = vmatprep.subr.mxu0 0.0
      %347 = vmatpush1.msra.mxu0 0.0
      %348 = vmatprep.subr.mxu0 0.0
      %349 = vmatpush1.msra.mxu0 0.0
      %350 = vmatprep.subr.mxu0 0.0
      %351 = vmatpush1.msra.mxu0 0.0
      %352 = vmatprep.subr.mxu0 0.0
      %353 = vmatpush1.msra.mxu0 0.0
      %354 = vmatprep.subr.mxu0 0.0
      %355 = vmatpush1.msra.mxu0 0.0
      %356 = vmatprep.subr.mxu0 0.0
      %357 = vmatpush1.msra.mxu0 0.0
      %358 = vmatprep.subr.mxu0 0.0
      %359 = vmatpush1.msra.mxu0 0.0
      %360 = vmatprep.subr.mxu0 0.0
      %361 = vmatpush1.msra.mxu0 0.0
      %362 = vmatprep.subr.mxu0 0.0
      %363 = vmatpush1.msra.mxu0 0.0
      %364 = vmatprep.subr.mxu0 0.0
      %365 = vmatpush1.msra.mxu0 0.0
      %366 = vmatprep.subr.mxu0 0.0
      %367 = vmatpush1.msra.mxu0 0.0
      %368 = vmatprep.subr.mxu0 0.0
      %369 = vmatpush1.msra.mxu0 0.0
      %370 = vmatprep.subr.mxu0 0.0
      %371 = vmatpush1.msra.mxu0 0.0
      %372 = vmatprep.subr.mxu0 0.0
      %373 = vmatpush1.msra.mxu0 0.0
      %374 = vmatprep.subr.mxu0 0.0
      %375 = vmatpush1.msra.mxu0 0.0
      %376 = vmatprep.subr.mxu0 0.0
      %377 = vmatpush1.msra.mxu0 0.0
      %378 = vmatprep.subr.mxu0 0.0
      %379 = vmatpush1.msra.mxu0 0.0
      %380 = vmatprep.subr.mxu0 0.0
      %381 = vmatpush1.msra.mxu0 0.0
      %382 = vmatprep.subr.mxu0 0.0
      %383 = vmatpush1.msra.mxu0 0.0
      %384 = vmatprep.subr.mxu0 0.0
      %385 = vmatpush1.msra.mxu0 0.0
      %386 = vmatprep.subr.mxu0 0.0
      %387 = vmatpush1.msra.mxu0 0.0
      %388 = vmatprep.mubr.f32.mxu0 0.0
      %389 = vmatmul.mubr.f32.gmra.mrb[0].mxu0 %v318
      %v390 = vpop.f32.mrb[0].mxu0
      %v391 = vadd.f32 %v315, %v390
      %v392 = vpop.f32.mrb[0].mxu0
      %393 = vdwg.mxu0
      %v394 = vxor.u32 %v391, 2147483648
      %v395 = vmul.f32 %v394, 1.442695
      %v396 = vpow.pop %v395
      %v397 = vadd.f32 %v396, 1.0
      %v398 = vrcp.pop %v397
      %v399 = vmul.f32 1.0, %v398
      %v400 = vlaneseq
      %v401 = vshrl.u32 %v400, 7
      %v402 = vsub.s32 0, %v401
      %v403 = vrot.slane %v399, %v402
      %405 = vbcast.lane.b32.xlu0 %v403, 256
      %v406 = vpop.permute.xlu0 %405
      %v407 = vmul.f32 %v225, %v406
      %v408 = vmul.f32 %v226, %v406
      %409 = vst [vmem:[%s224] sm:$0xff] %v407
      %410 = vst [vmem:[%s224 + $0x8] sm:$0xff] %v408
      %p411 = scmp.lt.s32.totalorder %s16, 1
      %s412 = scalar_select %p411, %s16, 1
      %s413 = smul.addr %s412, 2
      %s414 = smul.addr %s413, 8
      %s415 = scalar_lea.vmem %s5, %s414
      // Predicated region
      $region41: #{se_forward.1} parent=39 // pred_check
        %p416 = pneg %p144
      $region42: #{se_forward.1} parent=39 // pred_check_branch
        %418 = sbr.rel (%p416) target = $region44
      $region43: #{se_forward.1} parent=39 // pred_region
        _
      $region44: #{se_forward.1} parent=39 // pred_fallthru
        _
    $region40: #{se_forward.1} parent=5 // pred_fallthru
      _
    %p419 = scmp.le.s32.totalorder 2, %s11
    // Predicated region
    $region45: #{se_forward.1} parent=5 // pred_check
      %p420 = pneg %p419
    $region46: #{se_forward.1} parent=5 // pred_check_branch
      %422 = sbr.rel (%p420) target = $region48
    $region47: #{se_forward.1} parent=5 // pred_region
      %s423 = ssub.s32 %s11, 2
      // Predicated region
      $region49: #{se_forward.1} parent=47 // pred_check
        %p424 = pneg %p150
      $region50: #{se_forward.1} parent=47 // pred_check_branch
        %426 = sbr.rel (%p424) target = $region52
      $region51: #{se_forward.1} parent=47 // pred_region
        %p427 = scmp.lt.s32.totalorder %s17, 1
        %s428 = scalar_select %p427, %s17, 1
        %s429 = smul.addr %s428, 2
        %s430 = smul.addr %s429, 8
        %s431 = scalar_lea.vmem %s5, %s430
      $region52: #{se_forward.1} parent=47 // pred_fallthru
        _
    $region48: #{se_forward.1} parent=5 // pred_fallthru
      _
  $region6: #{se_forward.1} parent=0 // loop_footer
    %s15 = sadd.s32 1, %s11
  $region7: #{se_forward.1} parent=0 // loop_footer_branch
    %10 = sbr.rel target = $region3
  $region8: #{se_forward.1} parent=0 // loop_exit
    _

</llo_original>
